<compile_context>
chip_gen: v5e
topology: v5e:2x2
jax: 0.10.0
libtpu: 0.0.40
codegen_flags: <defaults>
</compile_context>

<pallas_src>
import jax
import jax.numpy as jnp
from jax.experimental import pallas as pl
from jax.experimental.pallas import tpu as pltpu

HALF = jnp.bfloat16  # TPU-native stand-in for torch.float16


def fp16_linear_kernel(x_ref, w_ref, b_ref, o_ref, acc_ref):
    """One (tm, tn) output tile, accumulated over the K grid axis.

    x_ref : [tm, tk] float32   (pipeline-first-stage input, still fp32)
    w_ref : [tk, tn] bfloat16  (module.half() weight, stored [in, out])
    b_ref : [1,  tn] bfloat16  (module.half() bias)
    o_ref : [tm, tn] float32   (pipeline-last-stage output, back to fp32)
    acc_ref:[tm, tn] float32   (VMEM accumulator scratch)
    """
    k = pl.program_id(2)

    @pl.when(k == 0)
    def _():
        acc_ref[...] = jnp.zeros_like(acc_ref)

    # fp32_to_fp16(inputs): per-tile cast, then half matmul on the MXU with
    # f32 accumulation across K steps.
    x_half = x_ref[...].astype(HALF)
    acc_ref[...] += jnp.dot(
        x_half, w_ref[...], preferred_element_type=jnp.float32
    )

    # Finalize once per output tile (NOT per K step): the half Linear rounds
    # its matmul result to half, adds the half bias, and FP16Module then
    # converts the half output back to fp32 on the last pipeline stage.
    @pl.when(k == pl.num_programs(2) - 1)
    def _():
        y_half = acc_ref[...].astype(HALF)          # half matmul output
        y_half = y_half + b_ref[...]                # bias added in half
        o_ref[...] = y_half.astype(jnp.float32)     # fp16_to_fp32(outputs)


def _round_up(x, m):
    return ((x + m - 1) // m) * m


def fp16_module_forward(x_f32, w_half, b_half, *, tm=256, tn=512, tk=512):
    """FP16Module.forward for a Linear inner module.

    x_f32  : [S, B, H_in]  float32
    w_half : [H_in, H_out] bfloat16
    b_half : [1, H_out]    bfloat16
    returns [S, B, H_out]  float32
    """
    s, b, h_in = x_f32.shape
    h_out = w_half.shape[1]
    m = s * b

    # Cap tiles at the (padded) problem size while keeping TPU alignment:
    # tm multiple of 8 (f32 sublanes), tk/tn multiples of 128 (lane width,
    # lane-dense stores, full MXU columns).
    tm = min(tm, _round_up(m, 8))
    tk = min(tk, _round_up(h_in, 128))
    tn = min(tn, _round_up(h_out, 128))

    m_pad = _round_up(m, tm)
    k_pad = _round_up(h_in, tk)
    n_pad = _round_up(h_out, tn)

    # Zero-pad to tile multiples (zero K-padding contributes nothing to the
    # matmul; padded N columns are sliced off afterwards).
    x2d = x_f32.reshape(m, h_in)
    x2d = jnp.pad(x2d, ((0, m_pad - m), (0, k_pad - h_in)))
    w_p = jnp.pad(w_half, ((0, k_pad - h_in), (0, n_pad - h_out)))
    b_p = jnp.pad(b_half, ((0, 0), (0, n_pad - h_out)))

    grid = (m_pad // tm, n_pad // tn, k_pad // tk)

    # Per-step VMEM footprint (double-buffered inputs/outputs + accumulator),
    # with headroom; keep well under v7x's 64 MiB physical VMEM.
    vmem_bytes = 2 * (tm * tk * 4 + tk * tn * 2 + tn * 2 + tm * tn * 4) \
        + tm * tn * 4
    vmem_limit = min(max(2 * vmem_bytes, 16 * 1024 * 1024), 48 * 1024 * 1024)

    cost = pl.CostEstimate(
        flops=2 * m_pad * n_pad * k_pad,
        transcendentals=0,
        bytes_accessed=4 * m_pad * k_pad + 2 * k_pad * n_pad
        + 2 * n_pad + 4 * m_pad * n_pad,
    )

    out2d = pl.pallas_call(
        fp16_linear_kernel,
        out_shape=jax.ShapeDtypeStruct((m_pad, n_pad), jnp.float32),
        grid_spec=pltpu.PrefetchScalarGridSpec(
            num_scalar_prefetch=0,
            grid=grid,
            in_specs=[
                pl.BlockSpec((tm, tk), lambda i, j, k: (i, k)),
                pl.BlockSpec((tk, tn), lambda i, j, k: (k, j)),
                pl.BlockSpec((1, tn), lambda i, j, k: (0, j)),
            ],
            out_specs=pl.BlockSpec((tm, tn), lambda i, j, k: (i, j)),
            scratch_shapes=[pltpu.VMEM((tm, tn), jnp.float32)],
        ),
        compiler_params=pltpu.CompilerParams(
            dimension_semantics=("parallel", "parallel", "arbitrary"),
            vmem_limit_bytes=vmem_limit,
        ),
        cost_estimate=cost,
    )(x2d, w_p, b_p)

    return out2d[:m, :h_out].reshape(s, b, h_out)


def _reference(x_f32, w_half, b_half):
    """Plain-JAX FP16Module(Linear) reference with the same cast pipeline."""
    s, b, h_in = x_f32.shape
    h_out = w_half.shape[1]
    x_half = x_f32.astype(HALF).reshape(s * b, h_in)
    y_half = (x_half @ w_half + b_half).astype(HALF)
    return y_half.astype(jnp.float32).reshape(s, b, h_out)


if __name__ == "__main__":
    # TODO(synk): pipeline-stage checks (mpu.*), state_dict plumbing and the
    # embedding all_reduce in MegatronModule have no kernel equivalent; only
    # the forward cast->module->cast path is implemented.

    key = jax.random.PRNGKey(0)
    k_x, k_w, k_b, k_x2, k_w2 = jax.random.split(key, 5)

    # ---- Case 1: small Megatron-like shapes: seq=8, batch=2, hidden=32 ----
    S, B, H_IN, H_OUT = 8, 2, 32, 32
    x = jax.random.normal(k_x, (S, B, H_IN), dtype=jnp.float32)
    w_half = (0.02 * jax.random.normal(k_w, (H_IN, H_OUT),
                                       dtype=jnp.float32)).astype(HALF)
    b_half = (0.02 * jax.random.normal(k_b, (1, H_OUT),
                                       dtype=jnp.float32)).astype(HALF)

    out = jax.block_until_ready(fp16_module_forward(x, w_half, b_half))
    assert out.dtype == jnp.float32
    assert out.shape == (S, B, H_OUT)
    ref = _reference(x, w_half, b_half)
    assert jnp.allclose(out, ref, atol=1e-2, rtol=1e-2)

    # ---- Case 2: 128-aligned shapes with explicit small tiles so the grid
    #      actually iterates over N and K (exercises accumulator + finalize).
    S2, B2, H2_IN, H2_OUT = 8, 2, 256, 256
    x2 = jax.random.normal(k_x2, (S2, B2, H2_IN), dtype=jnp.float32)
    w2_half = (0.02 * jax.random.normal(k_w2, (H2_IN, H2_OUT),
                                        dtype=jnp.float32)).astype(HALF)
    b2_half = jnp.zeros((1, H2_OUT), dtype=HALF)

    out2 = jax.block_until_ready(
        fp16_module_forward(x2, w2_half, b2_half, tm=16, tn=128, tk=128)
    )
    assert out2.dtype == jnp.float32
    assert out2.shape == (S2, B2, H2_OUT)
    ref2 = _reference(x2, w2_half, b2_half)
    assert jnp.allclose(out2, ref2, atol=1e-2, rtol=1e-2)

    print("KERNEL_OK")
</pallas_src>

<mosaic_0001>
module attributes {stable_mosaic.version = 11 : i64} {
  func.func @fp16_linear_kernel(%arg0: i32, %arg1: i32, %arg2: i32, %arg3: memref<16x128xf32, #tpu.memory_space<vmem>>, %arg4: memref<128x128xbf16, #tpu.memory_space<vmem>>, %arg5: memref<1x128xbf16, #tpu.memory_space<vmem>>, %arg6: memref<16x128xf32, #tpu.memory_space<vmem>>, %arg7: memref<16x128xf32, #tpu.memory_space<vmem>>) attributes {dimension_semantics = [#tpu.dimension_semantics<parallel>, #tpu.dimension_semantics<parallel>, #tpu.dimension_semantics<arbitrary>], iteration_bounds = array<i64: 1, 1, 1>, scalar_prefetch = 0 : i64, scratch_operands = 1 : i64, tpu.core_type = #tpu.core_type<tc>, window_params = [{transform_indices = @transform_0, window_bounds = array<i64: 16, 128>}, {transform_indices = @transform_1, window_bounds = array<i64: 128, 128>}, {transform_indices = @transform_2, window_bounds = array<i64: 1, 128>}, {transform_indices = @transform_3, window_bounds = array<i64: 16, 128>}]} {
    %c0_i32 = arith.constant 0 : i32
    %0 = arith.cmpi eq, %arg2, %c0_i32 : i32
    %1 = arith.extui %0 : i1 to i32
    %c0_i32_0 = arith.constant 0 : i32
    %2 = arith.cmpi ne, %1, %c0_i32_0 : i32
    scf.if %2 {
      %cst_10 = arith.constant 0.000000e+00 : f32
      %13 = vector.broadcast %cst_10 : f32 to vector<16x128xf32>
      %c0_11 = arith.constant 0 : index
      %c0_12 = arith.constant 0 : index
      %14 = vector.load %arg7[%c0_11, %c0_12] : memref<16x128xf32, #tpu.memory_space<vmem>>, vector<16x128xf32>
      tpu.vector_store %arg7[%c0_11, %c0_12], %13 {strides = array<i32>} : memref<16x128xf32, #tpu.memory_space<vmem>>, vector<16x128xf32>,
    } else {
    }
    %c0 = arith.constant 0 : index
    %c0_1 = arith.constant 0 : index
    %3 = vector.load %arg3[%c0, %c0_1] : memref<16x128xf32, #tpu.memory_space<vmem>>, vector<16x128xf32>
    %4 = arith.truncf %3 : vector<16x128xf32> to vector<16x128xbf16>
    %c0_2 = arith.constant 0 : index
    %c0_3 = arith.constant 0 : index
    %5 = vector.load %arg7[%c0_2, %c0_3] : memref<16x128xf32, #tpu.memory_space<vmem>>, vector<16x128xf32>
    %c0_4 = arith.constant 0 : index
    %c0_5 = arith.constant 0 : index
    %6 = vector.load %arg4[%c0_4, %c0_5] : memref<128x128xbf16, #tpu.memory_space<vmem>>, vector<128x128xbf16>
    %cst = arith.constant dense<0.000000e+00> : vector<16x128xf32>
    %7 = tpu.matmul %4, %6, %cst {dimension_numbers = #tpu.dot_dimension_numbers<[1], [0], [0], [1], [0, 0, 1, 1], [], []>} : vector<16x128xbf16>, vector<128x128xbf16>, vector<16x128xf32> -> vector<16x128xf32>
    %8 = arith.addf %5, %7 : vector<16x128xf32>
    %c0_6 = arith.constant 0 : index
    %c0_7 = arith.constant 0 : index
    %9 = vector.load %arg7[%c0_6, %c0_7] : memref<16x128xf32, #tpu.memory_space<vmem>>, vector<16x128xf32>
    tpu.vector_store %arg7[%c0_6, %c0_7], %8 {strides = array<i32>} : memref<16x128xf32, #tpu.memory_space<vmem>>, vector<16x128xf32>,
    %c0_i32_8 = arith.constant 0 : i32
    %10 = arith.cmpi eq, %arg2, %c0_i32_8 : i32
    %11 = arith.extui %10 : i1 to i32
    %c0_i32_9 = arith.constant 0 : i32
    %12 = arith.cmpi ne, %11, %c0_i32_9 : i32
    scf.if %12 {
      %c0_10 = arith.constant 0 : index
      %c0_11 = arith.constant 0 : index
      %13 = vector.load %arg7[%c0_10, %c0_11] : memref<16x128xf32, #tpu.memory_space<vmem>>, vector<16x128xf32>
      %14 = arith.truncf %13 : vector<16x128xf32> to vector<16x128xbf16>
      %c0_12 = arith.constant 0 : index
      %c0_13 = arith.constant 0 : index
      %15 = vector.load %arg5[%c0_12, %c0_13] : memref<1x128xbf16, #tpu.memory_space<vmem>>, vector<1x128xbf16>
      %16 = vector.broadcast %15 : vector<1x128xbf16> to vector<16x128xbf16>
      %17 = arith.addf %14, %16 : vector<16x128xbf16>
      %18 = arith.extf %17 : vector<16x128xbf16> to vector<16x128xf32>
      %c0_14 = arith.constant 0 : index
      %c0_15 = arith.constant 0 : index
      %19 = vector.load %arg6[%c0_14, %c0_15] : memref<16x128xf32, #tpu.memory_space<vmem>>, vector<16x128xf32>
      tpu.vector_store %arg6[%c0_14, %c0_15], %18 {strides = array<i32>} : memref<16x128xf32, #tpu.memory_space<vmem>>, vector<16x128xf32>,
    } else {
    }
    return
  }
  func.func @transform_0(%arg0: i32, %arg1: i32, %arg2: i32) -> (i32, i32) {
    %c0_i32 = arith.constant 0 : i32
    return %arg0, %arg2 : i32, i32
  }
  func.func @transform_1(%arg0: i32, %arg1: i32, %arg2: i32) -> (i32, i32) {
    %c0_i32 = arith.constant 0 : i32
    return %arg2, %arg1 : i32, i32
  }
  func.func @transform_2(%arg0: i32, %arg1: i32, %arg2: i32) -> (i32, i32) {
    %c0_i32 = arith.constant 0 : i32
    %c0_i32_0 = arith.constant 0 : i32
    return %c0_i32, %arg1 : i32, i32
  }
  func.func @transform_3(%arg0: i32, %arg1: i32, %arg2: i32) -> (i32, i32) {
    %c0_i32 = arith.constant 0 : i32
    return %arg0, %arg1 : i32, i32
  }
}

</mosaic_0001>

<llo_original>
// kernel: tpu_custom_call.1
$region0: #{tpu_custom_call.1}
  #allocation0 [shape = 'u32[]', space=smem, size = 0x4, offset = 0x4, fixed_abs, tag = 'smem constant byte address 0x4 - core index']
  #allocation1 [shape = 'u32[72,128]{1,0:T(1,128)}', space=vmem, size = 0x9000, scoped, tag = 'internal scratch']
  #allocation2 [shape = 'f32[16,128]{1,0:T(8,128)}', space=vmem, size = 0x2000, scoped, tag = 'scratch operand']
  %s0 = inlined_call_operand.hbm [shape: f32[16,128], index: 0, kind: input, shape index: {}]
  %s1 = inlined_call_operand.hbm [shape: bf16[128,128], index: 1, kind: input, shape index: {}]
  %s2 = inlined_call_operand.vmem [shape: bf16[1,128], index: 2, kind: input, shape index: {}]
  %s3 = inlined_call_operand.hbm [shape: f32[16,128], index: 3, kind: output, shape index: {}]
  %s4 = sld [smem:[#allocation0]]
  $region38: #{tpu_custom_call.1} parent=0
    _
  %s6 = ssub.s32 1, %s4
  %s7 = scalar_select 0, %s6, %s4
  $region1: #{tpu_custom_call.1} parent=0
    #allocation3 [shape = 'u8[8192]{0}', space=vmem, size = 0x2000, scoped, tag = 'input window, operand 0, single buffered']
    #allocation4 [shape = 's32[1]{0}', space=sflag, size = 0x4, scoped, tag = 'scoped memory for tpu_custom_call.1']
    #allocation5 [shape = 's32[1]{0}', space=sflag, size = 0x4, scoped, tag = 'scoped memory for tpu_custom_call.1']
    #allocation6 [shape = 'u8[32768]{0}', space=vmem, size = 0x8000, scoped, tag = 'input window, operand 1, single buffered']
    #allocation7 [shape = 's32[1]{0}', space=sflag, size = 0x4, scoped, tag = 'scoped memory for tpu_custom_call.1']
    #allocation8 [shape = 'u8[8192]{0}', space=vmem, size = 0x2000, scoped, tag = 'output window, operand 0, single buffered']
    %8 = vsyncpa [#allocation4], 0
    %9 = vsyncpa [#allocation7], 0
    %10 = vsyncpa [#allocation5], 0
    // Predicated region
    $region2: #{tpu_custom_call.1} parent=1 // pred_check
      _
    $region3: #{tpu_custom_call.1} parent=1 // pred_check_branch
      %12 = sbr.rel (0) target = $region5
    $region4: #{tpu_custom_call.1} parent=1 // pred_region
      %14 = vsyncadd [#allocation4], 0
      %s15 = sshll.u32 %s0, 4
      %s16 = int_to_ptr.hbm [resolvable:$true] %s15
      %s17 = sshll.u32 [#allocation3], 4
      %s18 = int_to_ptr.vmem [resolvable:$true] %s17
      %23 = dma.hbm_to_vmem [thread:$0]  %s16, 256, %s18, [#allocation4], 128, 128, 8
    $region5: #{tpu_custom_call.1} parent=1 // pred_fallthru
      _
    // Predicated region
    $region6: #{tpu_custom_call.1} parent=1 // pred_check
      _
    $region7: #{tpu_custom_call.1} parent=1 // pred_check_branch
      %25 = sbr.rel (0) target = $region9
    $region8: #{tpu_custom_call.1} parent=1 // pred_region
      %27 = vsyncadd [#allocation7], 0
      %s28 = sshll.u32 %s1, 4
      %s29 = int_to_ptr.hbm [resolvable:$true] %s28
      %s30 = sshll.u32 [#allocation6], 4
      %s31 = int_to_ptr.vmem [resolvable:$true] %s30
      %36 = dma.hbm_to_vmem [thread:$0]  %s29, 1024, %s31, [#allocation7], 64, 64, 4
    $region9: #{tpu_custom_call.1} parent=1 // pred_fallthru
      _
    // Predicated region
    $region10: #{tpu_custom_call.1} parent=1 // pred_check
      _
    $region11: #{tpu_custom_call.1} parent=1 // pred_check_branch
      %38 = sbr.rel (0) target = $region13
    $region12: #{tpu_custom_call.1} parent=1 // pred_region
      _
    $region13: #{tpu_custom_call.1} parent=1 // pred_fallthru
      _
    // Predicated region
    $region14: #{tpu_custom_call.1} parent=1 // pred_check
      _
    $region15: #{tpu_custom_call.1} parent=1 // pred_check_branch
      %40 = sbr.rel (0) target = $region17
    $region16: #{tpu_custom_call.1} parent=1 // pred_region
      %42 = dma.done [#allocation4], 256
    $region17: #{tpu_custom_call.1} parent=1 // pred_fallthru
      _
    // Predicated region
    $region18: #{tpu_custom_call.1} parent=1 // pred_check
      _
    $region19: #{tpu_custom_call.1} parent=1 // pred_check_branch
      %44 = sbr.rel (0) target = $region21
    $region20: #{tpu_custom_call.1} parent=1 // pred_region
      %46 = dma.done [#allocation7], 1024
    $region21: #{tpu_custom_call.1} parent=1 // pred_fallthru
      _
    %p47 = scmp.eq.s32.totalorder 0, 0
    // Predicated region
    $region22: #{tpu_custom_call.1} parent=1 // pred_check
      %p48 = pneg %p47
    $region23: #{tpu_custom_call.1} parent=1 // pred_check_branch
      %50 = sbr.rel (%p48) target = $region25
    $region24: #{tpu_custom_call.1} parent=1 // pred_region
      %51 = vst [vmem:[#allocation2] sm:$0xff] 0.0
      %52 = vst [vmem:[#allocation2 + $0x8] sm:$0xff] 0.0
    $region25: #{tpu_custom_call.1} parent=1 // pred_fallthru
      _
    %v53 = vld [vmem:[#allocation3] sm:$0xff]
    %v54 = vld [vmem:[#allocation3 + $0x8] sm:$0xff]
    %v55 = vpack.c.bf16 %v54, %v53
    %v56 = vld [vmem:[#allocation2] sm:$0xff]
    %v57 = vld [vmem:[#allocation2 + $0x8] sm:$0xff]
    %v58 = vld [vmem:[#allocation6] sm:$0xf]
    %v59 = vld [vmem:[#allocation6 + $0x4] sm:$0xf]
    %v60 = vld [vmem:[#allocation6 + $0x8] sm:$0xf]
    %v61 = vld [vmem:[#allocation6 + $0xc] sm:$0xf]
    %v62 = vld [vmem:[#allocation6 + $0x10] sm:$0xf]
    %v63 = vld [vmem:[#allocation6 + $0x14] sm:$0xf]
    %v64 = vld [vmem:[#allocation6 + $0x18] sm:$0xf]
    %v65 = vld [vmem:[#allocation6 + $0x1c] sm:$0xf]
    %v66 = vld [vmem:[#allocation6 + $0x20] sm:$0xf]
    %v67 = vld [vmem:[#allocation6 + $0x24] sm:$0xf]
    %v68 = vld [vmem:[#allocation6 + $0x28] sm:$0xf]
    %v69 = vld [vmem:[#allocation6 + $0x2c] sm:$0xf]
    %v70 = vld [vmem:[#allocation6 + $0x30] sm:$0xf]
    %v71 = vld [vmem:[#allocation6 + $0x34] sm:$0xf]
    %v72 = vld [vmem:[#allocation6 + $0x38] sm:$0xf]
    %v73 = vld [vmem:[#allocation6 + $0x3c] sm:$0xf]
    %v90 = vunpack.c.l.b16 %v58
    %v91 = vunpack.c.l.b16 %v59
    %v92 = vunpack.c.l.b16 %v60
    %v93 = vunpack.c.l.b16 %v61
    %v94 = vunpack.c.l.b16 %v62
    %v95 = vunpack.c.l.b16 %v63
    %v96 = vunpack.c.l.b16 %v64
    %v97 = vunpack.c.l.b16 %v65
    %v98 = vunpack.c.l.b16 %v66
    %v99 = vunpack.c.l.b16 %v67
    %v100 = vunpack.c.l.b16 %v68
    %v101 = vunpack.c.l.b16 %v69
    %v102 = vunpack.c.l.b16 %v70
    %v103 = vunpack.c.l.b16 %v71
    %v104 = vunpack.c.l.b16 %v72
    %v105 = vunpack.c.l.b16 %v73
    %v106 = vpack.c.b16 %v91, %v90
    %v107 = vpack.c.b16 %v93, %v92
    %v108 = vpack.c.b16 %v95, %v94
    %v109 = vpack.c.b16 %v97, %v96
    %v110 = vpack.c.b16 %v99, %v98
    %v111 = vpack.c.b16 %v101, %v100
    %v112 = vpack.c.b16 %v103, %v102
    %v113 = vpack.c.b16 %v105, %v104
    %122 = vmatpush.bf16.msra.mxu0 %v113
    %123 = vmatpush.bf16.msra.mxu0 %v112
    %124 = vmatpush.bf16.msra.mxu0 %v111
    %125 = vmatpush.bf16.msra.mxu0 %v110
    %126 = vmatpush.bf16.msra.mxu0 %v109
    %127 = vmatpush.bf16.msra.mxu0 %v108
    %128 = vmatpush.bf16.msra.mxu0 %v107
    %129 = vmatpush.bf16.msra.mxu0 %v106
    %130 = vmatmul.bf16.gmra.mxu0 %v55
    %v131 = vpop.f32.mrf.mxu0
    %v132 = vadd.f32 0.0, %v131
    %v133 = vpop.f32.mrf.mxu0
    %v134 = vadd.f32 0.0, %v133
    %135 = vdwg.mxu0
    %v136 = vadd.f32 %v56, %v132
    %v137 = vadd.f32 %v57, %v134
    %138 = vst [vmem:[#allocation2] sm:$0xff] %v136
    %139 = vst [vmem:[#allocation2 + $0x8] sm:$0xff] %v137
    // Predicated region
    $region26: #{tpu_custom_call.1} parent=1 // pred_check
      %p140 = pneg %p47
    $region27: #{tpu_custom_call.1} parent=1 // pred_check_branch
      %142 = sbr.rel (%p140) target = $region29
    $region28: #{tpu_custom_call.1} parent=1 // pred_region
      %v143 = vld [vmem:[#allocation2] sm:$0xff]
      %v144 = vld [vmem:[#allocation2 + $0x8] sm:$0xff]
      %v145 = vpack.c.bf16 %v143, %v143
      %v146 = vpack.c.bf16 %v144, %v144
      %v147 = vld [vmem:[%s2] sm:$0x1]
      %v149 = vpack.i.b16 %v147, %v147
      %v151 = vperm.slane %v149, 0
      %v152 = vunpack.c.l.bf16 %v145
      %v153 = vunpack.c.l.bf16 %v146
      %v154 = vunpack.c.l.bf16 %v151
      %v155 = vadd.f32 %v152, %v154
      %v156 = vadd.f32 %v153, %v154
      %v157 = vpack.c.bf16 %v155, %v155
      %v158 = vpack.c.bf16 %v156, %v156
      %v159 = vunpack.c.l.bf16 %v157
      %v160 = vunpack.c.l.bf16 %v158
      %161 = vst [vmem:[#allocation8] sm:$0xff] %v159
      %162 = vst [vmem:[#allocation8 + $0x8] sm:$0xff] %v160
    $region29: #{tpu_custom_call.1} parent=1 // pred_fallthru
      _
    // Predicated region
    $region30: #{tpu_custom_call.1} parent=1 // pred_check
      _
    $region31: #{tpu_custom_call.1} parent=1 // pred_check_branch
      %164 = sbr.rel (0) target = $region33
    $region32: #{tpu_custom_call.1} parent=1 // pred_region
      %166 = vsyncadd [#allocation5], 0
      %s167 = sshll.u32 [#allocation8], 4
      %s168 = int_to_ptr.vmem [resolvable:$true] %s167
      %s169 = sshll.u32 %s3, 4
      %s170 = int_to_ptr.hbm [resolvable:$true] %s169
      %175 = dma.vmem_to_hbm [thread:$0]  %s168, 256, %s170, [#allocation5], 128, 128, 8
    $region33: #{tpu_custom_call.1} parent=1 // pred_fallthru
      _
    // Predicated region
    $region34: #{tpu_custom_call.1} parent=1 // pred_check
      _
    $region35: #{tpu_custom_call.1} parent=1 // pred_check_branch
      %177 = sbr.rel (0) target = $region37
    $region36: #{tpu_custom_call.1} parent=1 // pred_region
      %179 = dma.done [#allocation5], 256
    $region37: #{tpu_custom_call.1} parent=1 // pred_fallthru
      _
    %180 = vsyncpa [#allocation4], 1
    %181 = vsyncpa [#allocation7], 1
    %182 = vsyncpa [#allocation5], 1

</llo_original>
